<compile_context>
chip_gen: v7x
topology: tpu7x:2x2x1
jax: 0.10.0
libtpu: 0.0.40
codegen_flags: <defaults>
</compile_context>

<pallas_src>
import functools

import jax
import jax.numpy as jnp
from jax.experimental import pallas as pl
from jax.experimental.pallas import tpu as pltpu

# ----------------------------- problem sizes -------------------------------
BATCH = 2
SEQ = 8            # L
IN_FEATURES = 16   # must equal dim_inner for the `y + D * x` broadcast
DIM_INNER = 16     # ED
DT_RANK = 4        # R
D_STATE = 4        # N


# ------------------------------ Pallas kernel ------------------------------
def ssm_kernel(x_ref, w_ref, bdt_ref, at_ref, d_ref, o_ref, *,
               batch, seq_len, d_state, dim_inner):
    """Single invocation, whole batch.

    x_ref  : (L*B, ED)       time-major rows (r = t*B + b)
    w_ref  : (ED, ED + 2N)   fused [delta | B | C] projection
    bdt_ref: (1, ED)         dt-projection bias
    at_ref : (N, ED)         A^T  (A = -exp(A_log))
    d_ref  : (1, ED)         D
    o_ref  : (B, L*ED)       lane-dense output slab, out[b, t*ED + e] = y[b, t, e]
    """
    ed = dim_inner
    ns = d_state

    x = x_ref[...]                                            # (L*B, ED)

    # ---- single fused MXU projection: [delta_pre | B | C] ----
    proj = jnp.dot(x, w_ref[...], preferred_element_type=jnp.float32)
    z = proj[:, :ed] + bdt_ref[...]                           # (L*B, ED)
    # numerically stable softplus
    delta = jnp.maximum(z, 0.0) + jnp.log1p(jnp.exp(-jnp.abs(z)))
    b_mat = proj[:, ed:ed + ns]                               # (L*B, N)
    c_mat = proj[:, ed + ns:]                                 # (L*B, N)

    a_t = at_ref[...]                                         # (N, ED)

    # ---- hoisted, lane-dense (L*B, N*ED) intermediates (column = n*ED + e) ----
    # dA[r, n*ED+e]  = exp(delta[r, e] * A[e, n])   -- one batched EUP exp
    dA = jnp.exp(jnp.concatenate(
        [delta * a_t[i:i + 1, :] for i in range(ns)], axis=1))
    # dBx[r, n*ED+e] = delta[r, e] * B[r, n] * x[r, e]  -- pure VPU broadcasts
    dx = delta * x
    dBx = jnp.concatenate(
        [dx * b_mat[:, i:i + 1] for i in range(ns)], axis=1)
    # D * x term, hoisted
    ybase = x * d_ref[...]                                    # (L*B, ED)

    # ---- sequential selective scan; h lives in vregs, y built incrementally ----
    h = jnp.zeros((batch, ns * ed), jnp.float32)              # (B, N*ED)
    y_cols = []
    # TODO(synk): for large seq_len switch to lax.fori_loop over L-chunks with a
    # VMEM h-carry; full unroll is right at L=8.
    for t in range(seq_len):
        lo = t * batch                                        # contiguous row block
        h = dA[lo:lo + batch] * h + dBx[lo:lo + batch]        # (B, N*ED) fma
        c_t = c_mat[lo:lo + batch]                            # (B, N)
        y_t = ybase[lo:lo + batch]                            # (B, ED)
        for i in range(ns):                                   # C-contraction over N
            y_t = y_t + h[:, i * ed:(i + 1) * ed] * c_t[:, i:i + 1]
        y_cols.append(y_t)

    # single lane-dense store of the whole output slab
    o_ref[...] = jnp.concatenate(y_cols, axis=1).astype(o_ref.dtype)


# --------------------------------- wrapper ---------------------------------
def ssm_forward(x, w_deltabc, w_dt, b_dt, a_log, d_param):
    """x: (B, L, ED) float32.  Parameters follow the torch module shapes."""
    batch, seq_len, in_features = x.shape
    ed = w_dt.shape[0]        # dim_inner
    r = w_dt.shape[1]         # dt_rank
    n = a_log.shape[1]        # d_state
    # The torch module's `y + D * x` only broadcasts if in_features == dim_inner.
    assert in_features == ed, "SSM requires in_features == dim_inner"

    f32 = jnp.float32

    # Fused projection weight: x @ [W_fused | W_B | W_C]
    #   W_fused = W_deltaBC^T[:, :R] @ W_dt^T   (delta pre-activation, bias added in-kernel)
    w_dbc_t = w_deltabc.astype(f32).T                         # (ED, R + 2N)
    w_fused = w_dbc_t[:, :r] @ w_dt.astype(f32).T             # (ED, ED)
    w_all = jnp.concatenate([w_fused, w_dbc_t[:, r:]], axis=1)  # (ED, ED + 2N)

    a_t = (-jnp.exp(a_log.astype(f32))).T                     # (N, ED)
    bdt = b_dt.astype(f32).reshape(1, ed)                     # (1, ED)
    dprm = d_param.astype(f32).reshape(1, ed)                 # (1, ED)

    # Time-major flatten so each scan step reads a contiguous row block.
    x_tm = jnp.transpose(x.astype(f32), (1, 0, 2)).reshape(seq_len * batch, ed)

    kernel = functools.partial(ssm_kernel, batch=batch, seq_len=seq_len,
                               d_state=n, dim_inner=ed)

    vmem = pl.BlockSpec(memory_space=pltpu.MemorySpace.VMEM)  # full-block VMEM
    out2d = pl.pallas_call(
        kernel,
        out_shape=jax.ShapeDtypeStruct((batch, seq_len * ed), f32),
        in_specs=[vmem, vmem, vmem, vmem, vmem],
        out_specs=vmem,
    )(x_tm, w_all, bdt, a_t, dprm)

    # (B, L*ED) -> (B, L, ED) is a free row-major reshape.
    return out2d.reshape(batch, seq_len, ed)


# ---------------------------- pure-JAX reference ----------------------------
def ssm_reference(x, w_deltabc, w_dt, b_dt, a_log, d_param):
    a = -jnp.exp(a_log)
    delta_bc = x @ w_deltabc.T
    delta_raw = delta_bc[..., :DT_RANK]
    bm = delta_bc[..., DT_RANK:DT_RANK + D_STATE]
    cm = delta_bc[..., DT_RANK + D_STATE:]
    delta = jax.nn.softplus(delta_raw @ w_dt.T + b_dt)
    delta_a = jnp.exp(delta[..., None] * a)                      # (B,L,ED,N)
    bx = delta[..., None] * bm[:, :, None, :] * x[..., None]     # (B,L,ED,N)

    h = jnp.zeros((x.shape[0], DIM_INNER, D_STATE), jnp.float32)
    ys = []
    for t in range(x.shape[1]):
        h = delta_a[:, t] * h + bx[:, t]
        ys.append(jnp.sum(h * cm[:, t, None, :], axis=-1))
    y = jnp.stack(ys, axis=1)
    return y + d_param * x


# ----------------------------------- main -----------------------------------
if __name__ == "__main__":
    key = jax.random.PRNGKey(0)
    k_x, k_w1, k_w2, k_b = jax.random.split(key, 4)

    x = jax.random.normal(k_x, (BATCH, SEQ, IN_FEATURES), jnp.float32)

    # Deterministic parameter init (module __init__ shapes).
    w_deltabc = 0.1 * jax.random.normal(
        k_w1, (DT_RANK + 2 * D_STATE, IN_FEATURES), jnp.float32)   # Linear, no bias
    w_dt = 0.1 * jax.random.normal(k_w2, (DIM_INNER, DT_RANK), jnp.float32)
    b_dt = 0.1 * jax.random.normal(k_b, (DIM_INNER,), jnp.float32)
    a_log = jnp.log(jnp.tile(jnp.arange(1, D_STATE + 1, dtype=jnp.float32),
                             (DIM_INNER, 1)))                      # (ED, N)
    d_param = jnp.ones((DIM_INNER,), jnp.float32)

    y_kernel = jax.block_until_ready(
        ssm_forward(x, w_deltabc, w_dt, b_dt, a_log, d_param))
    y_ref = ssm_reference(x, w_deltabc, w_dt, b_dt, a_log, d_param)

    assert y_kernel.shape == (BATCH, SEQ, DIM_INNER)
    assert jnp.allclose(y_kernel, y_ref, rtol=1e-4, atol=1e-4), (
        float(jnp.max(jnp.abs(y_kernel - y_ref))))

    print("KERNEL_OK")
</pallas_src>

<mosaic_0001>
module attributes {stable_mosaic.version = 11 : i64} {
  func.func @ssm_kernel(%arg0: memref<16x16xf32, #tpu.memory_space<vmem>>, %arg1: memref<16x24xf32, #tpu.memory_space<vmem>>, %arg2: memref<1x16xf32, #tpu.memory_space<vmem>>, %arg3: memref<4x16xf32, #tpu.memory_space<vmem>>, %arg4: memref<1x16xf32, #tpu.memory_space<vmem>>, %arg5: memref<2x128xf32, #tpu.memory_space<vmem>>) attributes {dimension_semantics = [], scalar_prefetch = 0 : i64, scratch_operands = 0 : i64, tpu.core_type = #tpu.core_type<tc>} {
    %c0 = arith.constant 0 : index
    %c0_0 = arith.constant 0 : index
    %0 = vector.load %arg0[%c0, %c0_0] : memref<16x16xf32, #tpu.memory_space<vmem>>, vector<16x16xf32>
    %c0_1 = arith.constant 0 : index
    %c0_2 = arith.constant 0 : index
    %1 = vector.load %arg1[%c0_1, %c0_2] : memref<16x24xf32, #tpu.memory_space<vmem>>, vector<16x24xf32>
    %cst = arith.constant dense<0.000000e+00> : vector<16x24xf32>
    %2 = tpu.matmul %0, %1, %cst {dimension_numbers = #tpu.dot_dimension_numbers<[1], [0], [0], [1], [0, 0, 1, 1], [], []>} : vector<16x16xf32>, vector<16x24xf32>, vector<16x24xf32> -> vector<16x24xf32>
    %3 = vector.extract_strided_slice %2 {offsets = [0, 0], sizes = [16, 16], strides = [1, 1]} : vector<16x24xf32> to vector<16x16xf32>
    %c0_3 = arith.constant 0 : index
    %c0_4 = arith.constant 0 : index
    %4 = vector.load %arg2[%c0_3, %c0_4] : memref<1x16xf32, #tpu.memory_space<vmem>>, vector<1x16xf32>
    %5 = vector.broadcast %4 : vector<1x16xf32> to vector<16x16xf32>
    %6 = arith.addf %3, %5 : vector<16x16xf32>
    %cst_5 = arith.constant 0.000000e+00 : f32
    %7 = vector.broadcast %cst_5 : f32 to vector<16x16xf32>
    %8 = arith.maximumf %6, %7 : vector<16x16xf32>
    %9 = math.absf %6 : vector<16x16xf32>
    %cst_6 = arith.constant 0.000000e+00 : f32
    %10 = vector.broadcast %cst_6 : f32 to vector<16x16xf32>
    %11 = arith.subf %10, %9 : vector<16x16xf32>
    %12 = math.exp %11 : vector<16x16xf32>
    %13 = math.log1p %12 : vector<16x16xf32>
    %14 = arith.addf %8, %13 : vector<16x16xf32>
    %15 = vector.extract_strided_slice %2 {offsets = [0, 16], sizes = [16, 4], strides = [1, 1]} : vector<16x24xf32> to vector<16x4xf32>
    %16 = vector.extract_strided_slice %2 {offsets = [0, 20], sizes = [16, 4], strides = [1, 1]} : vector<16x24xf32> to vector<16x4xf32>
    %c0_7 = arith.constant 0 : index
    %c0_8 = arith.constant 0 : index
    %17 = vector.load %arg3[%c0_7, %c0_8] : memref<4x16xf32, #tpu.memory_space<vmem>>, vector<4x16xf32>
    %18 = vector.extract_strided_slice %17 {offsets = [0, 0], sizes = [1, 16], strides = [1, 1]} : vector<4x16xf32> to vector<1x16xf32>
    %19 = vector.broadcast %18 : vector<1x16xf32> to vector<16x16xf32>
    %20 = arith.mulf %14, %19 : vector<16x16xf32>
    %21 = vector.extract_strided_slice %17 {offsets = [1, 0], sizes = [1, 16], strides = [1, 1]} : vector<4x16xf32> to vector<1x16xf32>
    %22 = vector.broadcast %21 : vector<1x16xf32> to vector<16x16xf32>
    %23 = arith.mulf %14, %22 : vector<16x16xf32>
    %24 = vector.extract_strided_slice %17 {offsets = [2, 0], sizes = [1, 16], strides = [1, 1]} : vector<4x16xf32> to vector<1x16xf32>
    %25 = vector.broadcast %24 : vector<1x16xf32> to vector<16x16xf32>
    %26 = arith.mulf %14, %25 : vector<16x16xf32>
    %27 = vector.extract_strided_slice %17 {offsets = [3, 0], sizes = [1, 16], strides = [1, 1]} : vector<4x16xf32> to vector<1x16xf32>
    %28 = vector.broadcast %27 : vector<1x16xf32> to vector<16x16xf32>
    %29 = arith.mulf %14, %28 : vector<16x16xf32>
    %30 = tpu.concatenate %20, %23, %26, %29 in 1 : vector<16x16xf32>, vector<16x16xf32>, vector<16x16xf32>, vector<16x16xf32> -> vector<16x64xf32>
    %31 = math.exp %30 : vector<16x64xf32>
    %32 = arith.mulf %14, %0 : vector<16x16xf32>
    %33 = vector.extract_strided_slice %15 {offsets = [0, 0], sizes = [16, 1], strides = [1, 1]} : vector<16x4xf32> to vector<16x1xf32>
    %34 = vector.broadcast %33 : vector<16x1xf32> to vector<16x16xf32>
    %35 = arith.mulf %32, %34 : vector<16x16xf32>
    %36 = vector.extract_strided_slice %15 {offsets = [0, 1], sizes = [16, 1], strides = [1, 1]} : vector<16x4xf32> to vector<16x1xf32>
    %37 = vector.broadcast %36 : vector<16x1xf32> to vector<16x16xf32>
    %38 = arith.mulf %32, %37 : vector<16x16xf32>
    %39 = vector.extract_strided_slice %15 {offsets = [0, 2], sizes = [16, 1], strides = [1, 1]} : vector<16x4xf32> to vector<16x1xf32>
    %40 = vector.broadcast %39 : vector<16x1xf32> to vector<16x16xf32>
    %41 = arith.mulf %32, %40 : vector<16x16xf32>
    %42 = vector.extract_strided_slice %15 {offsets = [0, 3], sizes = [16, 1], strides = [1, 1]} : vector<16x4xf32> to vector<16x1xf32>
    %43 = vector.broadcast %42 : vector<16x1xf32> to vector<16x16xf32>
    %44 = arith.mulf %32, %43 : vector<16x16xf32>
    %45 = tpu.concatenate %35, %38, %41, %44 in 1 : vector<16x16xf32>, vector<16x16xf32>, vector<16x16xf32>, vector<16x16xf32> -> vector<16x64xf32>
    %c0_9 = arith.constant 0 : index
    %c0_10 = arith.constant 0 : index
    %46 = vector.load %arg4[%c0_9, %c0_10] : memref<1x16xf32, #tpu.memory_space<vmem>>, vector<1x16xf32>
    %47 = vector.broadcast %46 : vector<1x16xf32> to vector<16x16xf32>
    %48 = arith.mulf %0, %47 : vector<16x16xf32>
    %cst_11 = arith.constant 0.000000e+00 : f32
    %49 = vector.broadcast %cst_11 : f32 to vector<2x64xf32>
    %50 = vector.extract_strided_slice %31 {offsets = [0, 0], sizes = [2, 64], strides = [1, 1]} : vector<16x64xf32> to vector<2x64xf32>
    %51 = arith.mulf %50, %49 : vector<2x64xf32>
    %52 = vector.extract_strided_slice %45 {offsets = [0, 0], sizes = [2, 64], strides = [1, 1]} : vector<16x64xf32> to vector<2x64xf32>
    %53 = arith.addf %51, %52 : vector<2x64xf32>
    %54 = vector.extract_strided_slice %16 {offsets = [0, 0], sizes = [2, 4], strides = [1, 1]} : vector<16x4xf32> to vector<2x4xf32>
    %55 = vector.extract_strided_slice %48 {offsets = [0, 0], sizes = [2, 16], strides = [1, 1]} : vector<16x16xf32> to vector<2x16xf32>
    %56 = vector.extract_strided_slice %53 {offsets = [0, 0], sizes = [2, 16], strides = [1, 1]} : vector<2x64xf32> to vector<2x16xf32>
    %57 = vector.extract_strided_slice %54 {offsets = [0, 0], sizes = [2, 1], strides = [1, 1]} : vector<2x4xf32> to vector<2x1xf32>
    %58 = vector.broadcast %57 : vector<2x1xf32> to vector<2x16xf32>
    %59 = arith.mulf %56, %58 : vector<2x16xf32>
    %60 = arith.addf %55, %59 : vector<2x16xf32>
    %61 = vector.extract_strided_slice %53 {offsets = [0, 16], sizes = [2, 16], strides = [1, 1]} : vector<2x64xf32> to vector<2x16xf32>
    %62 = vector.extract_strided_slice %54 {offsets = [0, 1], sizes = [2, 1], strides = [1, 1]} : vector<2x4xf32> to vector<2x1xf32>
    %63 = vector.broadcast %62 : vector<2x1xf32> to vector<2x16xf32>
    %64 = arith.mulf %61, %63 : vector<2x16xf32>
    %65 = arith.addf %60, %64 : vector<2x16xf32>
    %66 = vector.extract_strided_slice %53 {offsets = [0, 32], sizes = [2, 16], strides = [1, 1]} : vector<2x64xf32> to vector<2x16xf32>
    %67 = vector.extract_strided_slice %54 {offsets = [0, 2], sizes = [2, 1], strides = [1, 1]} : vector<2x4xf32> to vector<2x1xf32>
    %68 = vector.broadcast %67 : vector<2x1xf32> to vector<2x16xf32>
    %69 = arith.mulf %66, %68 : vector<2x16xf32>
    %70 = arith.addf %65, %69 : vector<2x16xf32>
    %71 = vector.extract_strided_slice %53 {offsets = [0, 48], sizes = [2, 16], strides = [1, 1]} : vector<2x64xf32> to vector<2x16xf32>
    %72 = vector.extract_strided_slice %54 {offsets = [0, 3], sizes = [2, 1], strides = [1, 1]} : vector<2x4xf32> to vector<2x1xf32>
    %73 = vector.broadcast %72 : vector<2x1xf32> to vector<2x16xf32>
    %74 = arith.mulf %71, %73 : vector<2x16xf32>
    %75 = arith.addf %70, %74 : vector<2x16xf32>
    %76 = vector.extract_strided_slice %31 {offsets = [2, 0], sizes = [2, 64], strides = [1, 1]} : vector<16x64xf32> to vector<2x64xf32>
    %77 = arith.mulf %76, %53 : vector<2x64xf32>
    %78 = vector.extract_strided_slice %45 {offsets = [2, 0], sizes = [2, 64], strides = [1, 1]} : vector<16x64xf32> to vector<2x64xf32>
    %79 = arith.addf %77, %78 : vector<2x64xf32>
    %80 = vector.extract_strided_slice %16 {offsets = [2, 0], sizes = [2, 4], strides = [1, 1]} : vector<16x4xf32> to vector<2x4xf32>
    %81 = vector.extract_strided_slice %48 {offsets = [2, 0], sizes = [2, 16], strides = [1, 1]} : vector<16x16xf32> to vector<2x16xf32>
    %82 = vector.extract_strided_slice %79 {offsets = [0, 0], sizes = [2, 16], strides = [1, 1]} : vector<2x64xf32> to vector<2x16xf32>
    %83 = vector.extract_strided_slice %80 {offsets = [0, 0], sizes = [2, 1], strides = [1, 1]} : vector<2x4xf32> to vector<2x1xf32>
    %84 = vector.broadcast %83 : vector<2x1xf32> to vector<2x16xf32>
    %85 = arith.mulf %82, %84 : vector<2x16xf32>
    %86 = arith.addf %81, %85 : vector<2x16xf32>
    %87 = vector.extract_strided_slice %79 {offsets = [0, 16], sizes = [2, 16], strides = [1, 1]} : vector<2x64xf32> to vector<2x16xf32>
    %88 = vector.extract_strided_slice %80 {offsets = [0, 1], sizes = [2, 1], strides = [1, 1]} : vector<2x4xf32> to vector<2x1xf32>
    %89 = vector.broadcast %88 : vector<2x1xf32> to vector<2x16xf32>
    %90 = arith.mulf %87, %89 : vector<2x16xf32>
    %91 = arith.addf %86, %90 : vector<2x16xf32>
    %92 = vector.extract_strided_slice %79 {offsets = [0, 32], sizes = [2, 16], strides = [1, 1]} : vector<2x64xf32> to vector<2x16xf32>
    %93 = vector.extract_strided_slice %80 {offsets = [0, 2], sizes = [2, 1], strides = [1, 1]} : vector<2x4xf32> to vector<2x1xf32>
    %94 = vector.broadcast %93 : vector<2x1xf32> to vector<2x16xf32>
    %95 = arith.mulf %92, %94 : vector<2x16xf32>
    %96 = arith.addf %91, %95 : vector<2x16xf32>
    %97 = vector.extract_strided_slice %79 {offsets = [0, 48], sizes = [2, 16], strides = [1, 1]} : vector<2x64xf32> to vector<2x16xf32>
    %98 = vector.extract_strided_slice %80 {offsets = [0, 3], sizes = [2, 1], strides = [1, 1]} : vector<2x4xf32> to vector<2x1xf32>
    %99 = vector.broadcast %98 : vector<2x1xf32> to vector<2x16xf32>
    %100 = arith.mulf %97, %99 : vector<2x16xf32>
    %101 = arith.addf %96, %100 : vector<2x16xf32>
    %102 = vector.extract_strided_slice %31 {offsets = [4, 0], sizes = [2, 64], strides = [1, 1]} : vector<16x64xf32> to vector<2x64xf32>
    %103 = arith.mulf %102, %79 : vector<2x64xf32>
    %104 = vector.extract_strided_slice %45 {offsets = [4, 0], sizes = [2, 64], strides = [1, 1]} : vector<16x64xf32> to vector<2x64xf32>
    %105 = arith.addf %103, %104 : vector<2x64xf32>
    %106 = vector.extract_strided_slice %16 {offsets = [4, 0], sizes = [2, 4], strides = [1, 1]} : vector<16x4xf32> to vector<2x4xf32>
    %107 = vector.extract_strided_slice %48 {offsets = [4, 0], sizes = [2, 16], strides = [1, 1]} : vector<16x16xf32> to vector<2x16xf32>
    %108 = vector.extract_strided_slice %105 {offsets = [0, 0], sizes = [2, 16], strides = [1, 1]} : vector<2x64xf32> to vector<2x16xf32>
    %109 = vector.extract_strided_slice %106 {offsets = [0, 0], sizes = [2, 1], strides = [1, 1]} : vector<2x4xf32> to vector<2x1xf32>
    %110 = vector.broadcast %109 : vector<2x1xf32> to vector<2x16xf32>
    %111 = arith.mulf %108, %110 : vector<2x16xf32>
    %112 = arith.addf %107, %111 : vector<2x16xf32>
    %113 = vector.extract_strided_slice %105 {offsets = [0, 16], sizes = [2, 16], strides = [1, 1]} : vector<2x64xf32> to vector<2x16xf32>
    %114 = vector.extract_strided_slice %106 {offsets = [0, 1], sizes = [2, 1], strides = [1, 1]} : vector<2x4xf32> to vector<2x1xf32>
    %115 = vector.broadcast %114 : vector<2x1xf32> to vector<2x16xf32>
    %116 = arith.mulf %113, %115 : vector<2x16xf32>
    %117 = arith.addf %112, %116 : vector<2x16xf32>
    %118 = vector.extract_strided_slice %105 {offsets = [0, 32], sizes = [2, 16], strides = [1, 1]} : vector<2x64xf32> to vector<2x16xf32>
    %119 = vector.extract_strided_slice %106 {offsets = [0, 2], sizes = [2, 1], strides = [1, 1]} : vector<2x4xf32> to vector<2x1xf32>
    %120 = vector.broadcast %119 : vector<2x1xf32> to vector<2x16xf32>
    %121 = arith.mulf %118, %120 : vector<2x16xf32>
    %122 = arith.addf %117, %121 : vector<2x16xf32>
    %123 = vector.extract_strided_slice %105 {offsets = [0, 48], sizes = [2, 16], strides = [1, 1]} : vector<2x64xf32> to vector<2x16xf32>
    %124 = vector.extract_strided_slice %106 {offsets = [0, 3], sizes = [2, 1], strides = [1, 1]} : vector<2x4xf32> to vector<2x1xf32>
    %125 = vector.broadcast %124 : vector<2x1xf32> to vector<2x16xf32>
    %126 = arith.mulf %123, %125 : vector<2x16xf32>
    %127 = arith.addf %122, %126 : vector<2x16xf32>
    %128 = vector.extract_strided_slice %31 {offsets = [6, 0], sizes = [2, 64], strides = [1, 1]} : vector<16x64xf32> to vector<2x64xf32>
    %129 = arith.mulf %128, %105 : vector<2x64xf32>
    %130 = vector.extract_strided_slice %45 {offsets = [6, 0], sizes = [2, 64], strides = [1, 1]} : vector<16x64xf32> to vector<2x64xf32>
    %131 = arith.addf %129, %130 : vector<2x64xf32>
    %132 = vector.extract_strided_slice %16 {offsets = [6, 0], sizes = [2, 4], strides = [1, 1]} : vector<16x4xf32> to vector<2x4xf32>
    %133 = vector.extract_strided_slice %48 {offsets = [6, 0], sizes = [2, 16], strides = [1, 1]} : vector<16x16xf32> to vector<2x16xf32>
    %134 = vector.extract_strided_slice %131 {offsets = [0, 0], sizes = [2, 16], strides = [1, 1]} : vector<2x64xf32> to vector<2x16xf32>
    %135 = vector.extract_strided_slice %132 {offsets = [0, 0], sizes = [2, 1], strides = [1, 1]} : vector<2x4xf32> to vector<2x1xf32>
    %136 = vector.broadcast %135 : vector<2x1xf32> to vector<2x16xf32>
    %137 = arith.mulf %134, %136 : vector<2x16xf32>
    %138 = arith.addf %133, %137 : vector<2x16xf32>
    %139 = vector.extract_strided_slice %131 {offsets = [0, 16], sizes = [2, 16], strides = [1, 1]} : vector<2x64xf32> to vector<2x16xf32>
    %140 = vector.extract_strided_slice %132 {offsets = [0, 1], sizes = [2, 1], strides = [1, 1]} : vector<2x4xf32> to vector<2x1xf32>
    %141 = vector.broadcast %140 : vector<2x1xf32> to vector<2x16xf32>
    %142 = arith.mulf %139, %141 : vector<2x16xf32>
    %143 = arith.addf %138, %142 : vector<2x16xf32>
    %144 = vector.extract_strided_slice %131 {offsets = [0, 32], sizes = [2, 16], strides = [1, 1]} : vector<2x64xf32> to vector<2x16xf32>
    %145 = vector.extract_strided_slice %132 {offsets = [0, 2], sizes = [2, 1], strides = [1, 1]} : vector<2x4xf32> to vector<2x1xf32>
    %146 = vector.broadcast %145 : vector<2x1xf32> to vector<2x16xf32>
    %147 = arith.mulf %144, %146 : vector<2x16xf32>
    %148 = arith.addf %143, %147 : vector<2x16xf32>
    %149 = vector.extract_strided_slice %131 {offsets = [0, 48], sizes = [2, 16], strides = [1, 1]} : vector<2x64xf32> to vector<2x16xf32>
    %150 = vector.extract_strided_slice %132 {offsets = [0, 3], sizes = [2, 1], strides = [1, 1]} : vector<2x4xf32> to vector<2x1xf32>
    %151 = vector.broadcast %150 : vector<2x1xf32> to vector<2x16xf32>
    %152 = arith.mulf %149, %151 : vector<2x16xf32>
    %153 = arith.addf %148, %152 : vector<2x16xf32>
    %154 = vector.extract_strided_slice %31 {offsets = [8, 0], sizes = [2, 64], strides = [1, 1]} : vector<16x64xf32> to vector<2x64xf32>
    %155 = arith.mulf %154, %131 : vector<2x64xf32>
    %156 = vector.extract_strided_slice %45 {offsets = [8, 0], sizes = [2, 64], strides = [1, 1]} : vector<16x64xf32> to vector<2x64xf32>
    %157 = arith.addf %155, %156 : vector<2x64xf32>
    %158 = vector.extract_strided_slice %16 {offsets = [8, 0], sizes = [2, 4], strides = [1, 1]} : vector<16x4xf32> to vector<2x4xf32>
    %159 = vector.extract_strided_slice %48 {offsets = [8, 0], sizes = [2, 16], strides = [1, 1]} : vector<16x16xf32> to vector<2x16xf32>
    %160 = vector.extract_strided_slice %157 {offsets = [0, 0], sizes = [2, 16], strides = [1, 1]} : vector<2x64xf32> to vector<2x16xf32>
    %161 = vector.extract_strided_slice %158 {offsets = [0, 0], sizes = [2, 1], strides = [1, 1]} : vector<2x4xf32> to vector<2x1xf32>
    %162 = vector.broadcast %161 : vector<2x1xf32> to vector<2x16xf32>
    %163 = arith.mulf %160, %162 : vector<2x16xf32>
    %164 = arith.addf %159, %163 : vector<2x16xf32>
    %165 = vector.extract_strided_slice %157 {offsets = [0, 16], sizes = [2, 16], strides = [1, 1]} : vector<2x64xf32> to vector<2x16xf32>
    %166 = vector.extract_strided_slice %158 {offsets = [0, 1], sizes = [2, 1], strides = [1, 1]} : vector<2x4xf32> to vector<2x1xf32>
    %167 = vector.broadcast %166 : vector<2x1xf32> to vector<2x16xf32>
    %168 = arith.mulf %165, %167 : vector<2x16xf32>
    %169 = arith.addf %164, %168 : vector<2x16xf32>
    %170 = vector.extract_strided_slice %157 {offsets = [0, 32], sizes = [2, 16], strides = [1, 1]} : vector<2x64xf32> to vector<2x16xf32>
    %171 = vector.extract_strided_slice %158 {offsets = [0, 2], sizes = [2, 1], strides = [1, 1]} : vector<2x4xf32> to vector<2x1xf32>
    %172 = vector.broadcast %171 : vector<2x1xf32> to vector<2x16xf32>
    %173 = arith.mulf %170, %172 : vector<2x16xf32>
    %174 = arith.addf %169, %173 : vector<2x16xf32>
    %175 = vector.extract_strided_slice %157 {offsets = [0, 48], sizes = [2, 16], strides = [1, 1]} : vector<2x64xf32> to vector<2x16xf32>
    %176 = vector.extract_strided_slice %158 {offsets = [0, 3], sizes = [2, 1], strides = [1, 1]} : vector<2x4xf32> to vector<2x1xf32>
    %177 = vector.broadcast %176 : vector<2x1xf32> to vector<2x16xf32>
    %178 = arith.mulf %175, %177 : vector<2x16xf32>
    %179 = arith.addf %174, %178 : vector<2x16xf32>
    %180 = vector.extract_strided_slice %31 {offsets = [10, 0], sizes = [2, 64], strides = [1, 1]} : vector<16x64xf32> to vector<2x64xf32>
    %181 = arith.mulf %180, %157 : vector<2x64xf32>
    %182 = vector.extract_strided_slice %45 {offsets = [10, 0], sizes = [2, 64], strides = [1, 1]} : vector<16x64xf32> to vector<2x64xf32>
    %183 = arith.addf %181, %182 : vector<2x64xf32>
    %184 = vector.extract_strided_slice %16 {offsets = [10, 0], sizes = [2, 4], strides = [1, 1]} : vector<16x4xf32> to vector<2x4xf32>
    %185 = vector.extract_strided_slice %48 {offsets = [10, 0], sizes = [2, 16], strides = [1, 1]} : vector<16x16xf32> to vector<2x16xf32>
    %186 = vector.extract_strided_slice %183 {offsets = [0, 0], sizes = [2, 16], strides = [1, 1]} : vector<2x64xf32> to vector<2x16xf32>
    %187 = vector.extract_strided_slice %184 {offsets = [0, 0], sizes = [2, 1], strides = [1, 1]} : vector<2x4xf32> to vector<2x1xf32>
    %188 = vector.broadcast %187 : vector<2x1xf32> to vector<2x16xf32>
    %189 = arith.mulf %186, %188 : vector<2x16xf32>
    %190 = arith.addf %185, %189 : vector<2x16xf32>
    %191 = vector.extract_strided_slice %183 {offsets = [0, 16], sizes = [2, 16], strides = [1, 1]} : vector<2x64xf32> to vector<2x16xf32>
    %192 = vector.extract_strided_slice %184 {offsets = [0, 1], sizes = [2, 1], strides = [1, 1]} : vector<2x4xf32> to vector<2x1xf32>
    %193 = vector.broadcast %192 : vector<2x1xf32> to vector<2x16xf32>
    %194 = arith.mulf %191, %193 : vector<2x16xf32>
    %195 = arith.addf %190, %194 : vector<2x16xf32>
    %196 = vector.extract_strided_slice %183 {offsets = [0, 32], sizes = [2, 16], strides = [1, 1]} : vector<2x64xf32> to vector<2x16xf32>
    %197 = vector.extract_strided_slice %184 {offsets = [0, 2], sizes = [2, 1], strides = [1, 1]} : vector<2x4xf32> to vector<2x1xf32>
    %198 = vector.broadcast %197 : vector<2x1xf32> to vector<2x16xf32>
    %199 = arith.mulf %196, %198 : vector<2x16xf32>
    %200 = arith.addf %195, %199 : vector<2x16xf32>
    %201 = vector.extract_strided_slice %183 {offsets = [0, 48], sizes = [2, 16], strides = [1, 1]} : vector<2x64xf32> to vector<2x16xf32>
    %202 = vector.extract_strided_slice %184 {offsets = [0, 3], sizes = [2, 1], strides = [1, 1]} : vector<2x4xf32> to vector<2x1xf32>
    %203 = vector.broadcast %202 : vector<2x1xf32> to vector<2x16xf32>
    %204 = arith.mulf %201, %203 : vector<2x16xf32>
    %205 = arith.addf %200, %204 : vector<2x16xf32>
    %206 = vector.extract_strided_slice %31 {offsets = [12, 0], sizes = [2, 64], strides = [1, 1]} : vector<16x64xf32> to vector<2x64xf32>
    %207 = arith.mulf %206, %183 : vector<2x64xf32>
    %208 = vector.extract_strided_slice %45 {offsets = [12, 0], sizes = [2, 64], strides = [1, 1]} : vector<16x64xf32> to vector<2x64xf32>
    %209 = arith.addf %207, %208 : vector<2x64xf32>
    %210 = vector.extract_strided_slice %16 {offsets = [12, 0], sizes = [2, 4], strides = [1, 1]} : vector<16x4xf32> to vector<2x4xf32>
    %211 = vector.extract_strided_slice %48 {offsets = [12, 0], sizes = [2, 16], strides = [1, 1]} : vector<16x16xf32> to vector<2x16xf32>
    %212 = vector.extract_strided_slice %209 {offsets = [0, 0], sizes = [2, 16], strides = [1, 1]} : vector<2x64xf32> to vector<2x16xf32>
    %213 = vector.extract_strided_slice %210 {offsets = [0, 0], sizes = [2, 1], strides = [1, 1]} : vector<2x4xf32> to vector<2x1xf32>
    %214 = vector.broadcast %213 : vector<2x1xf32> to vector<2x16xf32>
    %215 = arith.mulf %212, %214 : vector<2x16xf32>
    %216 = arith.addf %211, %215 : vector<2x16xf32>
    %217 = vector.extract_strided_slice %209 {offsets = [0, 16], sizes = [2, 16], strides = [1, 1]} : vector<2x64xf32> to vector<2x16xf32>
    %218 = vector.extract_strided_slice %210 {offsets = [0, 1], sizes = [2, 1], strides = [1, 1]} : vector<2x4xf32> to vector<2x1xf32>
    %219 = vector.broadcast %218 : vector<2x1xf32> to vector<2x16xf32>
    %220 = arith.mulf %217, %219 : vector<2x16xf32>
    %221 = arith.addf %216, %220 : vector<2x16xf32>
    %222 = vector.extract_strided_slice %209 {offsets = [0, 32], sizes = [2, 16], strides = [1, 1]} : vector<2x64xf32> to vector<2x16xf32>
    %223 = vector.extract_strided_slice %210 {offsets = [0, 2], sizes = [2, 1], strides = [1, 1]} : vector<2x4xf32> to vector<2x1xf32>
    %224 = vector.broadcast %223 : vector<2x1xf32> to vector<2x16xf32>
    %225 = arith.mulf %222, %224 : vector<2x16xf32>
    %226 = arith.addf %221, %225 : vector<2x16xf32>
    %227 = vector.extract_strided_slice %209 {offsets = [0, 48], sizes = [2, 16], strides = [1, 1]} : vector<2x64xf32> to vector<2x16xf32>
    %228 = vector.extract_strided_slice %210 {offsets = [0, 3], sizes = [2, 1], strides = [1, 1]} : vector<2x4xf32> to vector<2x1xf32>
    %229 = vector.broadcast %228 : vector<2x1xf32> to vector<2x16xf32>
    %230 = arith.mulf %227, %229 : vector<2x16xf32>
    %231 = arith.addf %226, %230 : vector<2x16xf32>
    %232 = vector.extract_strided_slice %31 {offsets = [14, 0], sizes = [2, 64], strides = [1, 1]} : vector<16x64xf32> to vector<2x64xf32>
    %233 = arith.mulf %232, %209 : vector<2x64xf32>
    %234 = vector.extract_strided_slice %45 {offsets = [14, 0], sizes = [2, 64], strides = [1, 1]} : vector<16x64xf32> to vector<2x64xf32>
    %235 = arith.addf %233, %234 : vector<2x64xf32>
    %236 = vector.extract_strided_slice %16 {offsets = [14, 0], sizes = [2, 4], strides = [1, 1]} : vector<16x4xf32> to vector<2x4xf32>
    %237 = vector.extract_strided_slice %48 {offsets = [14, 0], sizes = [2, 16], strides = [1, 1]} : vector<16x16xf32> to vector<2x16xf32>
    %238 = vector.extract_strided_slice %235 {offsets = [0, 0], sizes = [2, 16], strides = [1, 1]} : vector<2x64xf32> to vector<2x16xf32>
    %239 = vector.extract_strided_slice %236 {offsets = [0, 0], sizes = [2, 1], strides = [1, 1]} : vector<2x4xf32> to vector<2x1xf32>
    %240 = vector.broadcast %239 : vector<2x1xf32> to vector<2x16xf32>
    %241 = arith.mulf %238, %240 : vector<2x16xf32>
    %242 = arith.addf %237, %241 : vector<2x16xf32>
    %243 = vector.extract_strided_slice %235 {offsets = [0, 16], sizes = [2, 16], strides = [1, 1]} : vector<2x64xf32> to vector<2x16xf32>
    %244 = vector.extract_strided_slice %236 {offsets = [0, 1], sizes = [2, 1], strides = [1, 1]} : vector<2x4xf32> to vector<2x1xf32>
    %245 = vector.broadcast %244 : vector<2x1xf32> to vector<2x16xf32>
    %246 = arith.mulf %243, %245 : vector<2x16xf32>
    %247 = arith.addf %242, %246 : vector<2x16xf32>
    %248 = vector.extract_strided_slice %235 {offsets = [0, 32], sizes = [2, 16], strides = [1, 1]} : vector<2x64xf32> to vector<2x16xf32>
    %249 = vector.extract_strided_slice %236 {offsets = [0, 2], sizes = [2, 1], strides = [1, 1]} : vector<2x4xf32> to vector<2x1xf32>
    %250 = vector.broadcast %249 : vector<2x1xf32> to vector<2x16xf32>
    %251 = arith.mulf %248, %250 : vector<2x16xf32>
    %252 = arith.addf %247, %251 : vector<2x16xf32>
    %253 = vector.extract_strided_slice %235 {offsets = [0, 48], sizes = [2, 16], strides = [1, 1]} : vector<2x64xf32> to vector<2x16xf32>
    %254 = vector.extract_strided_slice %236 {offsets = [0, 3], sizes = [2, 1], strides = [1, 1]} : vector<2x4xf32> to vector<2x1xf32>
    %255 = vector.broadcast %254 : vector<2x1xf32> to vector<2x16xf32>
    %256 = arith.mulf %253, %255 : vector<2x16xf32>
    %257 = arith.addf %252, %256 : vector<2x16xf32>
    %258 = tpu.concatenate %75, %101, %127, %153, %179, %205, %231, %257 in 1 : vector<2x16xf32>, vector<2x16xf32>, vector<2x16xf32>, vector<2x16xf32>, vector<2x16xf32>, vector<2x16xf32>, vector<2x16xf32>, vector<2x16xf32> -> vector<2x128xf32>
    %c0_12 = arith.constant 0 : index
    %c0_13 = arith.constant 0 : index
    %259 = vector.load %arg5[%c0_12, %c0_13] : memref<2x128xf32, #tpu.memory_space<vmem>>, vector<2x128xf32>
    tpu.vector_store %arg5[%c0_12, %c0_13], %258 {strides = array<i32>} : memref<2x128xf32, #tpu.memory_space<vmem>>, vector<2x128xf32>,
    return
  }
}

</mosaic_0001>

<llo_original>
// kernel: tpu_custom_call.1
$region0: #{tpu_custom_call.1}
  #allocation0 [shape = 'u32[]', space=smem, size = 0x4, offset = 0x4, fixed_abs, tag = 'smem constant byte address 0x4 - core index']
  #allocation1 [shape = 'u32[144,128]{1,0:T(1,128)}', space=vmem, size = 0x12000, scoped, tag = 'internal scratch']
  %s0 = inlined_call_operand.hbm [shape: f32[16,16], index: 0, kind: input, shape index: {}]
  %s1 = inlined_call_operand.hbm [shape: f32[16,24], index: 1, kind: input, shape index: {}]
  %s2 = inlined_call_operand.vmem [shape: f32[1,16], index: 2, kind: input, shape index: {}]
  %s3 = inlined_call_operand.vmem [shape: f32[4,16], index: 3, kind: input, shape index: {}]
  %s4 = inlined_call_operand.vmem [shape: f32[1,16], index: 4, kind: input, shape index: {}]
  %s5 = inlined_call_operand.hbm [shape: f32[2,128], index: 5, kind: output, shape index: {}]
  %s6 = sld [smem:[#allocation0]]
  $region38: #{tpu_custom_call.1} parent=0
    _
  %s8 = ssub.s32 1, %s6
  %s9 = scalar_select 0, %s8, %s6
  $region1: #{tpu_custom_call.1} parent=0
    #allocation2 [shape = 'u8[8192]{0}', space=vmem, size = 0x2000, scoped, tag = 'input window, operand 0, single buffered']
    #allocation3 [shape = 's32[1]{0}', space=sflag, size = 0x4, scoped, tag = 'scoped memory for tpu_custom_call.1']
    #allocation4 [shape = 's32[1]{0}', space=sflag, size = 0x4, scoped, tag = 'scoped memory for tpu_custom_call.1']
    #allocation5 [shape = 'u8[8192]{0}', space=vmem, size = 0x2000, scoped, tag = 'input window, operand 1, single buffered']
    #allocation6 [shape = 's32[1]{0}', space=sflag, size = 0x4, scoped, tag = 'scoped memory for tpu_custom_call.1']
    #allocation7 [shape = 'u8[1024]{0}', space=vmem, size = 0x400, scoped, tag = 'output window, operand 0, single buffered']
    %10 = vsyncpa [#allocation3], 0
    %11 = vsyncpa [#allocation6], 0
    %12 = vsyncpa [#allocation4], 0
    // Predicated region
    $region2: #{tpu_custom_call.1} parent=1 // pred_check
      _
    $region3: #{tpu_custom_call.1} parent=1 // pred_check_branch
      %14 = sbr.rel (0) target = $region5
    $region4: #{tpu_custom_call.1} parent=1 // pred_region
      %s16 = ssub.s32 256, 256
      %17 = vsyncadd [#allocation3], %s16
      %s18 = sshll.u32 [#allocation2], 4
      %s19 = int_to_ptr.vmem [resolvable:$true] %s18
      %24 = dma.hbm_to_vmem [thread:$0]  %s0, 256, %s19, [#allocation3], 128, 128, 8
    $region5: #{tpu_custom_call.1} parent=1 // pred_fallthru
      _
    // Predicated region
    $region6: #{tpu_custom_call.1} parent=1 // pred_check
      _
    $region7: #{tpu_custom_call.1} parent=1 // pred_check_branch
      %26 = sbr.rel (0) target = $region9
    $region8: #{tpu_custom_call.1} parent=1 // pred_region
      %s28 = ssub.s32 256, 256
      %29 = vsyncadd [#allocation6], %s28
      %s30 = sshll.u32 [#allocation5], 4
      %s31 = int_to_ptr.vmem [resolvable:$true] %s30
      %36 = dma.hbm_to_vmem [thread:$0]  %s1, 256, %s31, [#allocation6], 128, 128, 8
    $region9: #{tpu_custom_call.1} parent=1 // pred_fallthru
      _
    // Predicated region
    $region10: #{tpu_custom_call.1} parent=1 // pred_check
      _
    $region11: #{tpu_custom_call.1} parent=1 // pred_check_branch
      %38 = sbr.rel (0) target = $region13
    $region12: #{tpu_custom_call.1} parent=1 // pred_region
      _
    $region13: #{tpu_custom_call.1} parent=1 // pred_fallthru
      _
    // Predicated region
    $region14: #{tpu_custom_call.1} parent=1 // pred_check
      _
    $region15: #{tpu_custom_call.1} parent=1 // pred_check_branch
      %40 = sbr.rel (0) target = $region17
    $region16: #{tpu_custom_call.1} parent=1 // pred_region
      _
    $region17: #{tpu_custom_call.1} parent=1 // pred_fallthru
      _
    // Predicated region
    $region18: #{tpu_custom_call.1} parent=1 // pred_check
      _
    $region19: #{tpu_custom_call.1} parent=1 // pred_check_branch
      %42 = sbr.rel (0) target = $region21
    $region20: #{tpu_custom_call.1} parent=1 // pred_region
      _
    $region21: #{tpu_custom_call.1} parent=1 // pred_fallthru
      _
    // Predicated region
    $region22: #{tpu_custom_call.1} parent=1 // pred_check
      _
    $region23: #{tpu_custom_call.1} parent=1 // pred_check_branch
      %44 = sbr.rel (0) target = $region25
    $region24: #{tpu_custom_call.1} parent=1 // pred_region
      %45 = dma.done [#allocation3], 256
    $region25: #{tpu_custom_call.1} parent=1 // pred_fallthru
      _
    // Predicated region
    $region26: #{tpu_custom_call.1} parent=1 // pred_check
      _
    $region27: #{tpu_custom_call.1} parent=1 // pred_check_branch
      %47 = sbr.rel (0) target = $region29
    $region28: #{tpu_custom_call.1} parent=1 // pred_region
      %48 = dma.done [#allocation6], 256
    $region29: #{tpu_custom_call.1} parent=1 // pred_fallthru
      _
    %v49 = vld [vmem:[#allocation2] sm:$0xff]
    %v50 = vld [vmem:[#allocation2 + $0x8] sm:$0xff]
    %v51 = vld [vmem:[#allocation5] sm:$0xff]
    %v52 = vld [vmem:[#allocation5 + $0x8] sm:$0xff]
    %vm53 = vcmask 130048
    %v55 = vsel %vm53, %v49, 0
    %v58 = vsel %vm53, %v50, 0
    %60 = vmatprep.subr.mxu0 0.0
    %61 = vmatpush1.msra.mxu0 %v51
    %62 = vmatprep.subr.mxu0 0.0
    %63 = vmatpush1.msra.mxu0 %v52
    %64 = vmatprep.subr.mxu0 0.0
    %65 = vmatpush1.msra.mxu0 0.0
    %66 = vmatprep.subr.mxu0 0.0
    %67 = vmatpush1.msra.mxu0 0.0
    %68 = vmatprep.subr.mxu0 0.0
    %69 = vmatpush1.msra.mxu0 0.0
    %70 = vmatprep.subr.mxu0 0.0
    %71 = vmatpush1.msra.mxu0 0.0
    %72 = vmatprep.subr.mxu0 0.0
    %73 = vmatpush1.msra.mxu0 0.0
    %74 = vmatprep.subr.mxu0 0.0
    %75 = vmatpush1.msra.mxu0 0.0
    %76 = vmatprep.subr.mxu0 0.0
    %77 = vmatpush1.msra.mxu0 0.0
    %78 = vmatprep.subr.mxu0 0.0
    %79 = vmatpush1.msra.mxu0 0.0
    %80 = vmatprep.subr.mxu0 0.0
    %81 = vmatpush1.msra.mxu0 0.0
    %82 = vmatprep.subr.mxu0 0.0
    %83 = vmatpush1.msra.mxu0 0.0
    %84 = vmatprep.subr.mxu0 0.0
    %85 = vmatpush1.msra.mxu0 0.0
    %86 = vmatprep.subr.mxu0 0.0
    %87 = vmatpush1.msra.mxu0 0.0
    %88 = vmatprep.subr.mxu0 0.0
    %89 = vmatpush1.msra.mxu0 0.0
    %90 = vmatprep.subr.mxu0 0.0
    %91 = vmatpush1.msra.mxu0 0.0
    %92 = vmatprep.subr.mxu0 0.0
    %93 = vmatpush1.msra.mxu0 0.0
    %94 = vmatprep.subr.mxu0 0.0
    %95 = vmatpush1.msra.mxu0 0.0
    %96 = vmatprep.subr.mxu0 0.0
    %97 = vmatpush1.msra.mxu0 0.0
    %98 = vmatprep.subr.mxu0 0.0
    %99 = vmatpush1.msra.mxu0 0.0
    %100 = vmatprep.subr.mxu0 0.0
    %101 = vmatpush1.msra.mxu0 0.0
    %102 = vmatprep.subr.mxu0 0.0
    %103 = vmatpush1.msra.mxu0 0.0
    %104 = vmatprep.subr.mxu0 0.0
    %105 = vmatpush1.msra.mxu0 0.0
    %106 = vmatprep.subr.mxu0 0.0
    %107 = vmatpush1.msra.mxu0 0.0
    %108 = vmatprep.subr.mxu0 0.0
    %109 = vmatpush1.msra.mxu0 0.0
    %110 = vmatprep.subr.mxu0 0.0
    %111 = vmatpush1.msra.mxu0 0.0
    %112 = vmatprep.subr.mxu0 0.0
    %113 = vmatpush1.msra.mxu0 0.0
    %114 = vmatprep.subr.mxu0 0.0
    %115 = vmatpush1.msra.mxu0 0.0
    %116 = vmatprep.subr.mxu0 0.0
    %117 = vmatpush1.msra.mxu0 0.0
    %118 = vmatprep.subr.mxu0 0.0
    %119 = vmatpush1.msra.mxu0 0.0
    %120 = vmatprep.subr.mxu0 0.0
    %121 = vmatpush1.msra.mxu0 0.0
    %122 = vmatprep.subr.mxu0 0.0
    %123 = vmatpush1.msra.mxu0 0.0
    %124 = vmatprep.mubr.f32.mxu0 0.0
    %125 = vmatmul.mubr.f32.gmra.mrb[0].mxu0 %v55
    %v126 = vpop.f32.mrb[0].mxu0
    %v127 = vadd.f32 0.0, %v126
    %v128 = vpop.f32.mrb[0].mxu0
    %129 = vmatprep.mubr.f32.mxu0 0.0
    %130 = vmatmul.mubr.f32.gmra.mrb[0].mxu0 %v58
    %v131 = vpop.f32.mrb[0].mxu0
    %v132 = vadd.f32 0.0, %v131
    %v133 = vpop.f32.mrb[0].mxu0
    %134 = vdwg.mxu0
    %v135 = vld [vmem:[%s2] sm:$0x1]
    %v137 = vlaneseq
    %v138 = vshrl.u32 %v137, 7
    %v139 = vsub.s32 0, %v138
    %v140 = vrot.slane %v135, %v139
    %v142 = vadd.f32 %v127, %v140
    %v143 = vadd.f32 %v132, %v140
    %v144 = vmax.f32 %v142, 0.0
    %v145 = vmax.f32 %v143, 0.0
    %v146 = vand.u32 2147483647, %v142
    %v147 = vand.u32 2147483647, %v143
    %v148 = vsub.f32 0.0, %v146
    %v149 = vsub.f32 0.0, %v147
    %v150 = vmul.f32 %v148, 1.442695
    %v151 = vpow.pop %v150
    %v152 = vmul.f32 %v149, 1.442695
    %v153 = vpow.pop %v152
    %v154 = vadd.f32 %v151, 1.0
    %v155 = vlog2.pop %v154
    %v156 = vmul.f32 %v155, 0.6931472
    %v157 = vmul.f32 -0.5, %v151
    %v158 = vadd.f32 %v157, 1.0
    %v159 = vmul.f32 %v158, %v151
    %v160 = vand.u32 2147483647, %v151
    %vm161 = vcmp.lt.f32.partialorder %v160, 0.0004427343
    %v162 = vsel %vm161, %v159, %v156
    %v163 = vadd.f32 %v153, 1.0
    %v164 = vlog2.pop %v163
    %v165 = vmul.f32 %v164, 0.6931472
    %v166 = vmul.f32 -0.5, %v153
    %v167 = vadd.f32 %v166, 1.0
    %v168 = vmul.f32 %v167, %v153
    %v169 = vand.u32 2147483647, %v153
    %vm170 = vcmp.lt.f32.partialorder %v169, 0.0004427343
    %v171 = vsel %vm170, %v168, %v165
    %v172 = vadd.f32 %v144, %v162
    %v173 = vadd.f32 %v145, %v171
    %v174 = vld [vmem:[%s3] sm:$0xf]
    %v175 = vlaneseq
    %v176 = vshrl.u32 %v175, 7
    %v177 = vsub.s32 0, %v176
    %v178 = vrot.slane %v174, %v177
    %v179 = vmul.f32 %v172, %v178
    %v180 = vmul.f32 %v173, %v178
    %v181 = vlaneseq
    %v182 = vshrl.u32 %v181, 7
    %v183 = vsub.s32 1, %v182
    %v184 = vrot.slane %v174, %v183
    %v185 = vmul.f32 %v172, %v184
    %v186 = vmul.f32 %v173, %v184
    %v187 = vlaneseq
    %v188 = vshrl.u32 %v187, 7
    %v189 = vsub.s32 2, %v188
    %v190 = vrot.slane %v174, %v189
    %v191 = vmul.f32 %v172, %v190
    %v192 = vmul.f32 %v173, %v190
    %v193 = vlaneseq
    %v194 = vshrl.u32 %v193, 7
    %v195 = vsub.s32 3, %v194
    %v196 = vrot.slane %v174, %v195
    %v197 = vmul.f32 %v172, %v196
    %v198 = vmul.f32 %v173, %v196
    %201 = vrot.lane.b32.xlu0 %v185, 16
    %v202 = vpop.permute.xlu0 %201
    %203 = vrot.lane.b32.xlu0 %v186, 16
    %v204 = vpop.permute.xlu0 %203
    %209 = vrot.lane.b32.xlu0 %v191, 32
    %v210 = vpop.permute.xlu0 %209
    %211 = vrot.lane.b32.xlu0 %v192, 32
    %v212 = vpop.permute.xlu0 %211
    %217 = vrot.lane.b32.xlu0 %v197, 48
    %v218 = vpop.permute.xlu0 %217
    %219 = vrot.lane.b32.xlu0 %v198, 48
    %v220 = vpop.permute.xlu0 %219
    %v223 = vsel %vm53, %v179, %v202
    %v224 = vsel %vm53, %v180, %v204
    %vm225 = vcmask 261120
    %v226 = vsel %vm225, %v223, %v210
    %v227 = vsel %vm225, %v224, %v212
    %vm228 = vcmask 392192
    %v229 = vsel %vm228, %v226, %v218
    %v230 = vsel %vm228, %v227, %v220
    %v231 = vmul.f32 %v229, 1.442695
    %v232 = vpow.pop %v231
    %v233 = vmul.f32 %v230, 1.442695
    %v234 = vpow.pop %v233
    %v235 = vmul.f32 %v172, %v49
    %v236 = vmul.f32 %v173, %v50
    %238 = vset.pattern.permute.xlu0 16
    %239 = vperm.xlu0 %238, %v127
    %v240 = vpop.permute.xlu0 %239
    %243 = vset.pattern.permute.xlu0 16
    %244 = vperm.xlu0 %243, %v132
    %v245 = vpop.permute.xlu0 %244
    %v247 = vmul.f32 %v235, %v240
    %v248 = vmul.f32 %v236, %v245
    %249 = vset.pattern.permute.xlu0 17
    %250 = vperm.xlu0 %249, %v127
    %v251 = vpop.permute.xlu0 %250
    %253 = vset.pattern.permute.xlu0 17
    %254 = vperm.xlu0 %253, %v132
    %v255 = vpop.permute.xlu0 %254
    %v257 = vmul.f32 %v235, %v251
    %v258 = vmul.f32 %v236, %v255
    %259 = vset.pattern.permute.xlu0 18
    %260 = vperm.xlu0 %259, %v127
    %v261 = vpop.permute.xlu0 %260
    %263 = vset.pattern.permute.xlu0 18
    %264 = vperm.xlu0 %263, %v132
    %v265 = vpop.permute.xlu0 %264
    %v267 = vmul.f32 %v235, %v261
    %v268 = vmul.f32 %v236, %v265
    %269 = vset.pattern.permute.xlu0 19
    %270 = vperm.xlu0 %269, %v127
    %v271 = vpop.permute.xlu0 %270
    %273 = vset.pattern.permute.xlu0 19
    %274 = vperm.xlu0 %273, %v132
    %v275 = vpop.permute.xlu0 %274
    %v277 = vmul.f32 %v235, %v271
    %v278 = vmul.f32 %v236, %v275
    %281 = vrot.lane.b32.xlu0 %v257, 16
    %v282 = vpop.permute.xlu0 %281
    %283 = vrot.lane.b32.xlu0 %v258, 16
    %v284 = vpop.permute.xlu0 %283
    %289 = vrot.lane.b32.xlu0 %v267, 32
    %v290 = vpop.permute.xlu0 %289
    %291 = vrot.lane.b32.xlu0 %v268, 32
    %v292 = vpop.permute.xlu0 %291
    %297 = vrot.lane.b32.xlu0 %v277, 48
    %v298 = vpop.permute.xlu0 %297
    %299 = vrot.lane.b32.xlu0 %v278, 48
    %v300 = vpop.permute.xlu0 %299
    %v303 = vsel %vm53, %v247, %v282
    %v304 = vsel %vm53, %v248, %v284
    %v305 = vsel %vm225, %v303, %v290
    %v306 = vsel %vm225, %v304, %v292
    %v307 = vsel %vm228, %v305, %v298
    %v308 = vsel %vm228, %v306, %v300
    %v309 = vld [vmem:[%s4] sm:$0x1]
    %v311 = vlaneseq
    %v312 = vshrl.u32 %v311, 7
    %v313 = vsub.s32 0, %v312
    %v314 = vrot.slane %v309, %v313
    %v316 = vmul.f32 %v49, %v314
    %v317 = vmul.f32 %v50, %v314
    %v318 = vmul.f32 %v232, 0.0
    %v319 = vadd.f32 %v318, %v307
    %320 = vset.pattern.permute.xlu0 20
    %321 = vperm.xlu0 %320, %v127
    %v322 = vpop.permute.xlu0 %321
    %v324 = vmul.f32 %v319, %v322
    %v325 = vadd.f32 %v316, %v324
    %326 = vset.pattern.permute.xlu0 21
    %327 = vperm.xlu0 %326, %v127
    %v328 = vpop.permute.xlu0 %327
    %v330 = vmul.f32 %v319, %v328
    %332 = vrot.lane.b32.xlu0 %v330, 112
    %v333 = vpop.permute.xlu0 %332
    %v335 = vadd.f32 %v325, %v333
    %336 = vset.pattern.permute.xlu0 22
    %337 = vperm.xlu0 %336, %v127
    %v338 = vpop.permute.xlu0 %337
    %v340 = vmul.f32 %v319, %v338
    %342 = vrot.lane.b32.xlu0 %v340, 96
    %v343 = vpop.permute.xlu0 %342
    %v345 = vadd.f32 %v335, %v343
    %346 = vset.pattern.permute.xlu0 23
    %347 = vperm.xlu0 %346, %v127
    %v348 = vpop.permute.xlu0 %347
    %v350 = vmul.f32 %v319, %v348
    %352 = vrot.lane.b32.xlu0 %v350, 80
    %v353 = vpop.permute.xlu0 %352
    %v355 = vadd.f32 %v345, %v353
    %v357 = vrot.slane %v319, 6
    %v359 = vmul.f32 %v232, %v357
    %v360 = vadd.f32 %v359, %v307
    %v361 = vmul.f32 %v360, %v322
    %v362 = vadd.f32 %v316, %v361
    %v363 = vmul.f32 %v360, %v328
    %365 = vrot.lane.b32.xlu0 %v363, 112
    %v366 = vpop.permute.xlu0 %365
    %v368 = vadd.f32 %v362, %v366
    %v369 = vmul.f32 %v360, %v338
    %371 = vrot.lane.b32.xlu0 %v369, 96
    %v372 = vpop.permute.xlu0 %371
    %v374 = vadd.f32 %v368, %v372
    %v375 = vmul.f32 %v360, %v348
    %377 = vrot.lane.b32.xlu0 %v375, 80
    %v378 = vpop.permute.xlu0 %377
    %v380 = vadd.f32 %v374, %v378
    %v382 = vrot.slane %v360, 6
    %v384 = vmul.f32 %v232, %v382
    %v385 = vadd.f32 %v384, %v307
    %v386 = vmul.f32 %v385, %v322
    %v387 = vadd.f32 %v316, %v386
    %v388 = vmul.f32 %v385, %v328
    %390 = vrot.lane.b32.xlu0 %v388, 112
    %v391 = vpop.permute.xlu0 %390
    %v393 = vadd.f32 %v387, %v391
    %v394 = vmul.f32 %v385, %v338
    %396 = vrot.lane.b32.xlu0 %v394, 96
    %v397 = vpop.permute.xlu0 %396
    %v399 = vadd.f32 %v393, %v397
    %v400 = vmul.f32 %v385, %v348
    %402 = vrot.lane.b32.xlu0 %v400, 80
    %v403 = vpop.permute.xlu0 %402
    %v405 = vadd.f32 %v399, %v403
    %v407 = vrot.slane %v385, 6
    %v409 = vmul.f32 %v232, %v407
    %v410 = vadd.f32 %v409, %v307
    %v411 = vmul.f32 %v410, %v322
    %v412 = vadd.f32 %v316, %v411
    %v413 = vmul.f32 %v410, %v328
    %415 = vrot.lane.b32.xlu0 %v413, 112
    %v416 = vpop.permute.xlu0 %415
    %v418 = vadd.f32 %v412, %v416
    %v419 = vmul.f32 %v410, %v338
    %421 = vrot.lane.b32.xlu0 %v419, 96
    %v422 = vpop.permute.xlu0 %421
    %v424 = vadd.f32 %v418, %v422
    %v425 = vmul.f32 %v410, %v348
    %427 = vrot.lane.b32.xlu0 %v425, 80
    %v428 = vpop.permute.xlu0 %427
    %v430 = vadd.f32 %v424, %v428
    %v432 = vrot.slane %v410, 6
    %v434 = vmul.f32 %v234, %v432
    %v435 = vadd.f32 %v434, %v308
    %436 = vset.pattern.permute.xlu0 20
    %437 = vperm.xlu0 %436, %v132
    %v438 = vpop.permute.xlu0 %437
    %v440 = vmul.f32 %v435, %v438
    %v441 = vadd.f32 %v317, %v440
    %442 = vset.pattern.permute.xlu0 21
    %443 = vperm.xlu0 %442, %v132
    %v444 = vpop.permute.xlu0 %443
    %v446 = vmul.f32 %v435, %v444
    %448 = vrot.lane.b32.xlu0 %v446, 112
    %v449 = vpop.permute.xlu0 %448
    %v451 = vadd.f32 %v441, %v449
    %452 = vset.pattern.permute.xlu0 22
    %453 = vperm.xlu0 %452, %v132
    %v454 = vpop.permute.xlu0 %453
    %v456 = vmul.f32 %v435, %v454
    %458 = vrot.lane.b32.xlu0 %v456, 96
    %v459 = vpop.permute.xlu0 %458
    %v461 = vadd.f32 %v451, %v459
    %462 = vset.pattern.permute.xlu0 23
    %463 = vperm.xlu0 %462, %v132
    %v464 = vpop.permute.xlu0 %463
    %v466 = vmul.f32 %v435, %v464
    %468 = vrot.lane.b32.xlu0 %v466, 80
    %v469 = vpop.permute.xlu0 %468
    %v471 = vadd.f32 %v461, %v469
    %v473 = vrot.slane %v435, 6
    %v475 = vmul.f32 %v234, %v473
    %v476 = vadd.f32 %v475, %v308
    %v477 = vmul.f32 %v476, %v438
    %v478 = vadd.f32 %v317, %v477
    %v479 = vmul.f32 %v476, %v444
    %481 = vrot.lane.b32.xlu0 %v479, 112
    %v482 = vpop.permute.xlu0 %481
    %v484 = vadd.f32 %v478, %v482
    %v485 = vmul.f32 %v476, %v454
    %487 = vrot.lane.b32.xlu0 %v485, 96
    %v488 = vpop.permute.xlu0 %487
    %v490 = vadd.f32 %v484, %v488
    %v491 = vmul.f32 %v476, %v464
    %493 = vrot.lane.b32.xlu0 %v491, 80
    %v494 = vpop.permute.xlu0 %493
    %v496 = vadd.f32 %v490, %v494
    %v498 = vrot.slane %v476, 6
    %v500 = vmul.f32 %v234, %v498
    %v501 = vadd.f32 %v500, %v308
    %v502 = vmul.f32 %v501, %v438
    %v503 = vadd.f32 %v317, %v502
    %v504 = vmul.f32 %v501, %v444
    %506 = vrot.lane.b32.xlu0 %v504, 112
    %v507 = vpop.permute.xlu0 %506
    %v509 = vadd.f32 %v503, %v507
    %v510 = vmul.f32 %v501, %v454
    %512 = vrot.lane.b32.xlu0 %v510, 96
    %v513 = vpop.permute.xlu0 %512
    %v515 = vadd.f32 %v509, %v513
    %v516 = vmul.f32 %v501, %v464
    %518 = vrot.lane.b32.xlu0 %v516, 80
    %v519 = vpop.permute.xlu0 %518
    %v521 = vadd.f32 %v515, %v519
    %v523 = vrot.slane %v501, 6
    %v525 = vmul.f32 %v234, %v523
    %v526 = vadd.f32 %v525, %v308
    %v527 = vmul.f32 %v526, %v438
    %v528 = vadd.f32 %v317, %v527
    %v529 = vmul.f32 %v526, %v444
    %531 = vrot.lane.b32.xlu0 %v529, 112
    %v532 = vpop.permute.xlu0 %531
    %v534 = vadd.f32 %v528, %v532
    %v535 = vmul.f32 %v526, %v454
    %537 = vrot.lane.b32.xlu0 %v535, 96
    %v538 = vpop.permute.xlu0 %537
    %v540 = vadd.f32 %v534, %v538
    %v541 = vmul.f32 %v526, %v464
    %543 = vrot.lane.b32.xlu0 %v541, 80
    %v544 = vpop.permute.xlu0 %543
    %v546 = vadd.f32 %v540, %v544
    %v548 = vrot.slane %v380, 2
    %549 = vrot.lane.b32.xlu0 %v548, 16
    %v550 = vpop.permute.xlu0 %549
    %v553 = vrot.slane %v405, 4
    %554 = vrot.lane.b32.xlu0 %v553, 32
    %v555 = vpop.permute.xlu0 %554
    %v558 = vrot.slane %v430, 6
    %559 = vrot.lane.b32.xlu0 %v558, 48
    %v560 = vpop.permute.xlu0 %559
    %563 = vrot.lane.b32.xlu0 %v471, 64
    %v564 = vpop.permute.xlu0 %563
    %v567 = vrot.slane %v496, 2
    %568 = vrot.lane.b32.xlu0 %v567, 80
    %v569 = vpop.permute.xlu0 %568
    %v572 = vrot.slane %v521, 4
    %573 = vrot.lane.b32.xlu0 %v572, 96
    %v574 = vpop.permute.xlu0 %573
    %v577 = vrot.slane %v546, 6
    %578 = vrot.lane.b32.xlu0 %v577, 112
    %v579 = vpop.permute.xlu0 %578
    %v581 = vsel %vm53, %v355, %v550
    %v582 = vsel %vm225, %v581, %v555
    %v583 = vsel %vm228, %v582, %v560
    %vm584 = vcmask 523264
    %v585 = vsel %vm584, %v583, %v564
    %vm586 = vcmask 654336
    %v587 = vsel %vm586, %v585, %v569
    %vm588 = vcmask 785408
    %v589 = vsel %vm588, %v587, %v574
    %vm590 = vcmask 916480
    %v591 = vsel %vm590, %v589, %v579
    %592 = vst [vmem:[#allocation7] sm:$0x3] %v591
    // Predicated region
    $region30: #{tpu_custom_call.1} parent=1 // pred_check
      _
    $region31: #{tpu_custom_call.1} parent=1 // pred_check_branch
      %594 = sbr.rel (0) target = $region33
    $region32: #{tpu_custom_call.1} parent=1 // pred_region
      %s596 = ssub.s32 32, 32
      %597 = vsyncadd [#allocation4], %s596
      %s599 = sshll.u32 [#allocation7], 4
      %s600 = int_to_ptr.vmem [resolvable:$true] %s599
      %602 = dma.vmem_to_hbm [thread:$0]  %s600, 32, %s5, [#allocation4]
    $region33: #{tpu_custom_call.1} parent=1 // pred_fallthru
      _
    // Predicated region
    $region34: #{tpu_custom_call.1} parent=1 // pred_check
      _
    $region35: #{tpu_custom_call.1} parent=1 // pred_check_branch
      %604 = sbr.rel (0) target = $region37
    $region36: #{tpu_custom_call.1} parent=1 // pred_region
      %605 = dma.done [#allocation4], 32
    $region37: #{tpu_custom_call.1} parent=1 // pred_fallthru
      _
    %606 = vsyncpa [#allocation3], 1
    %607 = vsyncpa [#allocation6], 1
    %608 = vsyncpa [#allocation4], 1

</llo_original>
